<compile_context>
chip_gen: v6e
topology: v6e:2x2x1
jax: 0.10.0
libtpu: 0.0.40
codegen_flags: <defaults>
</compile_context>

<pallas_src>
import numpy as np
import jax
import jax.numpy as jnp
from jax.experimental import pallas as pl
from jax.experimental.pallas import tpu as pltpu


def _round_up(x, m):
    return ((x + m - 1) // m) * m


def _roll_lanes(x, shift, width):
    shift = shift % width
    if shift == 0:
        return x
    return pltpu.roll(x, shift, 1)


# --------------------------------------------------------------------------
# Fused kernel (per batch tile):
#   xc   = relu(x_tile @ W_sub + b_sub)                  (TB, Gp)
#   aggr = 0.5*(roll(xc,+1) + roll(xc,-1))  (ring mean)  (TB, Gp)
#   h_c  = relu(aggr*wl_c + xc*wr_c + bl_c)   c = 0,1
#   out  = h_0 @ Wo0 + h_1 @ Wo1 + b_out                 (TB, Op)
# --------------------------------------------------------------------------
def make_kernel(num_genes, g_pad):
    G, Gp = int(num_genes), int(g_pad)
    wrap_left = (Gp - G + 1) % Gp      # places xc[G-1] at lane 0
    wrap_right = (G - 1) % Gp          # places xc[0]   at lane G-1
    main_right = (Gp - 1) % Gp         # roll by -1

    def kernel(sage_ref, x_ref, wsub_ref, bsub_ref, wo0_ref, wo1_ref,
               bout_ref, out_ref):
        # ---- fused per-gene subNet linears: single bf16 MXU matmul --------
        xc = jnp.dot(x_ref[...], wsub_ref[...],
                     preferred_element_type=jnp.float32)           # (TB, Gp)
        xc = jnp.maximum(xc + bsub_ref[...], 0.0)                  # cat ReLU
        # Invariant: padded lanes G..Gp-1 of xc are exactly 0 because the
        # matching W_sub columns / b_sub entries are zero-padded.

        # ---- SAGE mean aggregation over the undirected ring (in-deg 2) ----
        left = _roll_lanes(xc, 1, Gp)                 # left[j]  = xc[j-1]
        right = _roll_lanes(xc, main_right, Gp)       # right[j] = xc[j+1]
        if Gp != G:
            # Ring wrap-around across the zero-padded lanes: left[0] and
            # right[G-1] currently read padded (zero) lanes, so an additive
            # masked correction suffices (no selects needed).
            lane = jax.lax.broadcasted_iota(jnp.int32, (1, Gp), 1)
            m_first = (lane == 0).astype(jnp.float32)
            m_last = (lane == G - 1).astype(jnp.float32)
            left = left + _roll_lanes(xc, wrap_left, Gp) * m_first
            right = right + _roll_lanes(xc, wrap_right, Gp) * m_last
        aggr = 0.5 * (left + right)
        # (padded lanes of aggr/h carry finite garbage; the matching rows of
        #  Wo0/Wo1 are exactly zero, so they never reach the output.)

        # ---- SAGEConv lin_l (bias) / lin_r (no bias), gene_dim = 2 --------
        wl0 = sage_ref[0]
        wl1 = sage_ref[1]
        wr0 = sage_ref[2]
        wr1 = sage_ref[3]
        bl0 = sage_ref[4]
        bl1 = sage_ref[5]
        h0 = jnp.maximum(aggr * wl0 + xc * wr0 + bl0, 0.0)
        h1 = jnp.maximum(aggr * wl1 + xc * wr1 + bl1, 0.0)

        # ---- epilogue Linear: two accumulating matmuls from vregs ---------
        out = jnp.dot(h0.astype(jnp.bfloat16), wo0_ref[...],
                      preferred_element_type=jnp.float32)
        out = out + jnp.dot(h1.astype(jnp.bfloat16), wo1_ref[...],
                            preferred_element_type=jnp.float32)
        out_ref[...] = out + bout_ref[...]

    return kernel


# --------------------------------------------------------------------------
# One-time weight packing (hoisted out of the per-call forward): pad to lane
# multiples, cast matmul operands to bf16.  Zero padding is load-bearing: the
# kernel's ring-wrap fix and output matmul rely on padded rows/cols being 0.
# --------------------------------------------------------------------------
def pack_params(params):
    sage, w_sub, b_sub, wo0, wo1, b_out = params
    K, G = int(w_sub.shape[0]), int(w_sub.shape[1])
    O = int(b_out.shape[0])
    Kp = _round_up(K, 128)
    Gp = _round_up(G, 128)
    Op = _round_up(O, 128)

    w_sub_p = jnp.zeros((Kp, Gp), jnp.bfloat16).at[:K, :G].set(
        w_sub.astype(jnp.bfloat16))
    b_sub_p = jnp.zeros((1, Gp), jnp.float32).at[0, :G].set(b_sub)
    wo0_p = jnp.zeros((Gp, Op), jnp.bfloat16).at[:G, :O].set(
        wo0.astype(jnp.bfloat16))
    wo1_p = jnp.zeros((Gp, Op), jnp.bfloat16).at[:G, :O].set(
        wo1.astype(jnp.bfloat16))
    b_out_p = jnp.zeros((1, Op), jnp.float32).at[0, :O].set(b_out)

    dims = dict(K=K, G=G, O=O, Kp=Kp, Gp=Gp, Op=Op)
    return (jnp.asarray(sage, jnp.float32), w_sub_p, b_sub_p,
            wo0_p, wo1_p, b_out_p, dims)


def net_sageconv_forward(x, packed):
    """x: (B, num_tf, total_peaks) float32.  Returns (B, num_output) float32."""
    sage, w_sub_p, b_sub_p, wo0_p, wo1_p, b_out_p, dims = packed
    B = x.shape[0]
    K, G, O = dims["K"], dims["G"], dims["O"]
    Kp, Gp, Op = dims["Kp"], dims["Gp"], dims["Op"]
    assert x.shape[1] * x.shape[2] == K

    # --- batch tiling: >= 2 grid steps when possible (v7x has 2 TCs) ------
    B16 = _round_up(B, 16)                        # bf16 sublane packing
    if B16 <= 16:
        TILE_B = B16
    else:
        # cap 512: large enough to amortize per-step overhead on v5e/v6e,
        # small enough to stay within the v7x 64 MiB VMEM plan at demo K.
        TILE_B = min(512, max(16, _round_up(pl.cdiv(B16, 2), 16)))
    Bp = _round_up(B16, TILE_B)
    n_tiles = Bp // TILE_B

    # --- x: cast and pad only when needed ----------------------------------
    x_flat = x.reshape(B, K).astype(jnp.bfloat16)
    if Bp == B and Kp == K:
        x_p = x_flat
    else:
        x_p = jnp.pad(x_flat, ((0, Bp - B), (0, Kp - K)))

    # --- VMEM budget: resident weights (double-buffered by default) +
    #     double-buffered x/out tiles + intermediates ------------------------
    est = (2 * (Kp * Gp * 2 + 2 * Gp * Op * 2 + (Gp + Op) * 4)    # weights
           + 2 * TILE_B * Kp * 2 + 2 * TILE_B * Op * 4            # x/out x2
           + 8 * TILE_B * Gp * 4)                                 # temporaries
    try:
        phys_vmem = int(pltpu.get_tpu_info().vmem_capacity_bytes)
    except Exception:
        phys_vmem = 64 * 1024 * 1024                              # v7x floor
    vmem_limit = int(min(max(2 * est, 32 * 1024 * 1024),
                         int(phys_vmem * 0.8)))

    flops = 2 * Bp * Kp * Gp + 4 * Bp * Gp * Op
    bytes_accessed = (Bp * Kp * 2 + Kp * Gp * 2 + 2 * Gp * Op * 2
                      + Bp * Op * 4 + (Gp + Op) * 4 + 6 * 4)
    cost = pl.CostEstimate(flops=flops, transcendentals=0,
                           bytes_accessed=bytes_accessed)

    kernel = make_kernel(G, Gp)

    out = pl.pallas_call(
        kernel,
        out_shape=jax.ShapeDtypeStruct((Bp, Op), jnp.float32),
        grid_spec=pltpu.PrefetchScalarGridSpec(
            num_scalar_prefetch=0,
            grid=(n_tiles,),
            in_specs=[
                pl.BlockSpec(memory_space=pltpu.MemorySpace.SMEM),  # SAGE scalars
                pl.BlockSpec((TILE_B, Kp), lambda i: (i, 0)),       # x tile (pipelined)
                pl.BlockSpec((Kp, Gp), lambda i: (0, 0)),           # W_sub (resident)
                pl.BlockSpec((1, Gp), lambda i: (0, 0)),            # b_sub (resident)
                pl.BlockSpec((Gp, Op), lambda i: (0, 0)),           # Wo0   (resident)
                pl.BlockSpec((Gp, Op), lambda i: (0, 0)),           # Wo1   (resident)
                pl.BlockSpec((1, Op), lambda i: (0, 0)),            # b_out (resident)
            ],
            out_specs=pl.BlockSpec((TILE_B, Op), lambda i: (i, 0)),
        ),
        compiler_params=pltpu.CompilerParams(
            dimension_semantics=("parallel",),   # shard batch tiles over TCs
            vmem_limit_bytes=vmem_limit,
        ),
        cost_estimate=cost,
    )(sage, x_p, w_sub_p, b_sub_p, wo0_p, wo1_p, b_out_p)

    return out[:B, :O]


# --------------------------------------------------------------------------
# Parameter construction (deterministic, mirrors the PyTorch module __init__)
# --------------------------------------------------------------------------
def build_params(key, num_genes, num_peaks, num_tf, num_output):
    total_peaks = int(np.sum(num_peaks))
    cut = np.concatenate([[0], np.cumsum(num_peaks)]).astype(np.int32)
    K = num_tf * total_peaks
    G = num_genes
    gene_dim = 2

    keys = jax.random.split(key, 8)

    # --- subNet fc1 weights: gene i has Linear(num_tf*num_peak_i, 1) -------
    w_full = np.zeros((num_tf, total_peaks, G), dtype=np.float32)
    b_sub = np.zeros((G,), dtype=np.float32)
    sub_keys = jax.random.split(keys[0], G)
    for i in range(G):
        npk = int(num_peaks[i])
        wi = jax.random.normal(sub_keys[i], (num_tf, npk), dtype=jnp.float32) * 0.1
        w_full[:, cut[i]:cut[i + 1], i] = np.asarray(wi)
        b_sub[i] = float(jax.random.normal(jax.random.fold_in(keys[1], i), ()) * 0.1)
    w_sub = jnp.asarray(w_full.reshape(K, G))
    b_sub = jnp.asarray(b_sub)

    # --- SAGEConv lin_l (1->2, bias) / lin_r (1->2, no bias) ---------------
    # Mimics initialize_parameters(): row 0 = 2*rand+0.1, row 1 ~ U(-2, 2).
    wl0 = 2.0 * float(jax.random.uniform(keys[2], ())) + 0.1
    wl1 = float(jax.random.uniform(keys[3], (), minval=-2.0, maxval=2.0))
    wr0 = 2.0 * float(jax.random.uniform(keys[4], ())) + 0.1
    wr1 = float(jax.random.uniform(keys[5], (), minval=-2.0, maxval=2.0))
    bl = jax.random.normal(keys[6], (gene_dim,), dtype=jnp.float32) * 0.1
    sage_scalars = jnp.asarray(
        [wl0, wl1, wr0, wr1, float(bl[0]), float(bl[1])], dtype=jnp.float32)

    # --- output Linear(num_genes*gene_dim, num_output) ---------------------
    # PyTorch weight is (O, 2G) with column 2*i+c = (gene i, channel c).
    w_out = jax.random.normal(keys[7], (num_output, G * gene_dim),
                              dtype=jnp.float32) * 0.1
    b_out = jax.random.normal(jax.random.fold_in(keys[7], 1), (num_output,),
                              dtype=jnp.float32) * 0.1
    w_out_np = np.asarray(w_out)
    wo0 = jnp.asarray(w_out_np[:, 0::2].T)      # (G, O), channel 0 columns
    wo1 = jnp.asarray(w_out_np[:, 1::2].T)      # (G, O), channel 1 columns
    b_out = jnp.asarray(b_out)

    return (sage_scalars, w_sub, b_sub, wo0, wo1, b_out)


# --------------------------------------------------------------------------
# Pure-JAX reference (same math, same bf16 rounding points, no Pallas)
# --------------------------------------------------------------------------
def ref_forward(x, params):
    sage, w_sub, b_sub, wo0, wo1, b_out = params
    B = x.shape[0]
    xf = x.reshape(B, -1).astype(jnp.bfloat16).astype(jnp.float32)
    ws = w_sub.astype(jnp.bfloat16).astype(jnp.float32)
    xc = jnp.maximum(xf @ ws + b_sub[None, :], 0.0)
    # ring-graph SAGE mean aggregation (in-degree 2)
    aggr = 0.5 * (jnp.roll(xc, 1, axis=1) + jnp.roll(xc, -1, axis=1))
    wl0, wl1, wr0, wr1, bl0, bl1 = [sage[i] for i in range(6)]
    h0 = jnp.maximum(aggr * wl0 + xc * wr0 + bl0, 0.0)
    h1 = jnp.maximum(aggr * wl1 + xc * wr1 + bl1, 0.0)
    h0b = h0.astype(jnp.bfloat16).astype(jnp.float32)
    h1b = h1.astype(jnp.bfloat16).astype(jnp.float32)
    w0 = wo0.astype(jnp.bfloat16).astype(jnp.float32)
    w1 = wo1.astype(jnp.bfloat16).astype(jnp.float32)
    return h0b @ w0 + h1b @ w1 + b_out[None, :]


if __name__ == "__main__":
    # Small, module-consistent shapes.
    batch = 4
    num_tf = 8
    num_genes = 8
    num_peaks = np.array([3, 5, 2, 4, 6, 3, 5, 4], dtype=np.int32)   # per gene
    num_output = 3
    total_peaks = int(num_peaks.sum())                               # 32

    key = jax.random.PRNGKey(0)
    k_x, k_p = jax.random.split(key)
    x = jax.random.normal(k_x, (batch, num_tf, total_peaks), dtype=jnp.float32)

    params = build_params(k_p, num_genes, num_peaks, num_tf, num_output)
    packed = pack_params(params)     # one-time weight pad/cast (hoisted)

    out = jax.block_until_ready(net_sageconv_forward(x, packed))
    ref = jax.block_until_ready(ref_forward(x, params))

    assert out.shape == (batch, num_output)
    np.testing.assert_allclose(np.asarray(out), np.asarray(ref),
                               rtol=1e-2, atol=1e-2)
    print("KERNEL_OK")
</pallas_src>

<mosaic_0001>
module attributes {stable_mosaic.version = 11 : i64} {
  func.func @kernel(%arg0: i32, %arg1: memref<6xf32, #tpu.memory_space<smem>>, %arg2: memref<16x256xbf16, #tpu.memory_space<vmem>>, %arg3: memref<256x128xbf16, #tpu.memory_space<vmem>>, %arg4: memref<1x128xf32, #tpu.memory_space<vmem>>, %arg5: memref<128x128xbf16, #tpu.memory_space<vmem>>, %arg6: memref<128x128xbf16, #tpu.memory_space<vmem>>, %arg7: memref<1x128xf32, #tpu.memory_space<vmem>>, %arg8: memref<16x128xf32, #tpu.memory_space<vmem>>) attributes {dimension_semantics = [#tpu.dimension_semantics<parallel>], iteration_bounds = array<i64: 1>, scalar_prefetch = 0 : i64, scratch_operands = 0 : i64, tpu.core_type = #tpu.core_type<tc>, window_params = [{transform_indices = @transform_0, window_bounds = array<i64: 6>}, {transform_indices = @transform_1, window_bounds = array<i64: 16, 256>}, {pipeline_mode = #tpu.pipeline_mode<synchronous>, transform_indices = @transform_2, window_bounds = array<i64: 256, 128>}, {pipeline_mode = #tpu.pipeline_mode<synchronous>, transform_indices = @transform_3, window_bounds = array<i64: 1, 128>}, {pipeline_mode = #tpu.pipeline_mode<synchronous>, transform_indices = @transform_4, window_bounds = array<i64: 128, 128>}, {pipeline_mode = #tpu.pipeline_mode<synchronous>, transform_indices = @transform_5, window_bounds = array<i64: 128, 128>}, {pipeline_mode = #tpu.pipeline_mode<synchronous>, transform_indices = @transform_6, window_bounds = array<i64: 1, 128>}, {transform_indices = @transform_7, window_bounds = array<i64: 16, 128>}]} {
    %c0 = arith.constant 0 : index
    %c0_0 = arith.constant 0 : index
    %0 = vector.load %arg2[%c0, %c0_0] : memref<16x256xbf16, #tpu.memory_space<vmem>>, vector<16x256xbf16>
    %c0_1 = arith.constant 0 : index
    %c0_2 = arith.constant 0 : index
    %1 = vector.load %arg3[%c0_1, %c0_2] : memref<256x128xbf16, #tpu.memory_space<vmem>>, vector<256x128xbf16>
    %cst = arith.constant dense<0.000000e+00> : vector<16x128xf32>
    %2 = tpu.matmul %0, %1, %cst {dimension_numbers = #tpu.dot_dimension_numbers<[1], [0], [0], [1], [0, 0, 1, 1], [], []>} : vector<16x256xbf16>, vector<256x128xbf16>, vector<16x128xf32> -> vector<16x128xf32>
    %c0_3 = arith.constant 0 : index
    %c0_4 = arith.constant 0 : index
    %3 = vector.load %arg4[%c0_3, %c0_4] : memref<1x128xf32, #tpu.memory_space<vmem>>, vector<1x128xf32>
    %4 = vector.broadcast %3 : vector<1x128xf32> to vector<16x128xf32>
    %5 = arith.addf %2, %4 : vector<16x128xf32>
    %cst_5 = arith.constant 0.000000e+00 : f32
    %6 = vector.broadcast %cst_5 : f32 to vector<16x128xf32>
    %7 = arith.maximumf %5, %6 : vector<16x128xf32>
    %c1_i32 = arith.constant 1 : i32
    %8 = tpu.dynamic_rotate %7 by %c1_i32 dim 1 : vector<16x128xf32>, i32 -> vector<16x128xf32>
    %c127_i32 = arith.constant 127 : i32
    %9 = tpu.dynamic_rotate %7 by %c127_i32 dim 1 : vector<16x128xf32>, i32 -> vector<16x128xf32>
    %10 = tpu.iota {dimensions = array<i32: 1>} : vector<1x128xi32>
    %c0_i32 = arith.constant 0 : i32
    %11 = vector.broadcast %c0_i32 : i32 to vector<1x128xi32>
    %12 = arith.cmpi eq, %10, %11 : vector<1x128xi32>
    %13 = arith.extui %12 : vector<1x128xi1> to vector<1x128xi32>
    %14 = arith.sitofp %13 : vector<1x128xi32> to vector<1x128xf32>
    %c7_i32 = arith.constant 7 : i32
    %15 = vector.broadcast %c7_i32 : i32 to vector<1x128xi32>
    %16 = arith.cmpi eq, %10, %15 : vector<1x128xi32>
    %17 = arith.extui %16 : vector<1x128xi1> to vector<1x128xi32>
    %18 = arith.sitofp %17 : vector<1x128xi32> to vector<1x128xf32>
    %c121_i32 = arith.constant 121 : i32
    %19 = tpu.dynamic_rotate %7 by %c121_i32 dim 1 : vector<16x128xf32>, i32 -> vector<16x128xf32>
    %20 = vector.broadcast %14 : vector<1x128xf32> to vector<16x128xf32>
    %21 = arith.mulf %19, %20 : vector<16x128xf32>
    %22 = arith.addf %8, %21 : vector<16x128xf32>
    %c7_i32_6 = arith.constant 7 : i32
    %23 = tpu.dynamic_rotate %7 by %c7_i32_6 dim 1 : vector<16x128xf32>, i32 -> vector<16x128xf32>
    %24 = vector.broadcast %18 : vector<1x128xf32> to vector<16x128xf32>
    %25 = arith.mulf %23, %24 : vector<16x128xf32>
    %26 = arith.addf %9, %25 : vector<16x128xf32>
    %27 = arith.addf %22, %26 : vector<16x128xf32>
    %cst_7 = arith.constant 5.000000e-01 : f32
    %28 = vector.broadcast %cst_7 : f32 to vector<16x128xf32>
    %29 = arith.mulf %28, %27 : vector<16x128xf32>
    %c0_8 = arith.constant 0 : index
    %30 = memref.load %arg1[%c0_8] : memref<6xf32, #tpu.memory_space<smem>>
    %c1 = arith.constant 1 : index
    %31 = memref.load %arg1[%c1] : memref<6xf32, #tpu.memory_space<smem>>
    %c2 = arith.constant 2 : index
    %32 = memref.load %arg1[%c2] : memref<6xf32, #tpu.memory_space<smem>>
    %c3 = arith.constant 3 : index
    %33 = memref.load %arg1[%c3] : memref<6xf32, #tpu.memory_space<smem>>
    %c4 = arith.constant 4 : index
    %34 = memref.load %arg1[%c4] : memref<6xf32, #tpu.memory_space<smem>>
    %c5 = arith.constant 5 : index
    %35 = memref.load %arg1[%c5] : memref<6xf32, #tpu.memory_space<smem>>
    %36 = vector.broadcast %30 : f32 to vector<16x128xf32>
    %37 = arith.mulf %29, %36 : vector<16x128xf32>
    %38 = vector.broadcast %32 : f32 to vector<16x128xf32>
    %39 = arith.mulf %7, %38 : vector<16x128xf32>
    %40 = arith.addf %37, %39 : vector<16x128xf32>
    %41 = vector.broadcast %34 : f32 to vector<16x128xf32>
    %42 = arith.addf %40, %41 : vector<16x128xf32>
    %cst_9 = arith.constant 0.000000e+00 : f32
    %43 = vector.broadcast %cst_9 : f32 to vector<16x128xf32>
    %44 = arith.maximumf %42, %43 : vector<16x128xf32>
    %45 = vector.broadcast %31 : f32 to vector<16x128xf32>
    %46 = arith.mulf %29, %45 : vector<16x128xf32>
    %47 = vector.broadcast %33 : f32 to vector<16x128xf32>
    %48 = arith.mulf %7, %47 : vector<16x128xf32>
    %49 = arith.addf %46, %48 : vector<16x128xf32>
    %50 = vector.broadcast %35 : f32 to vector<16x128xf32>
    %51 = arith.addf %49, %50 : vector<16x128xf32>
    %cst_10 = arith.constant 0.000000e+00 : f32
    %52 = vector.broadcast %cst_10 : f32 to vector<16x128xf32>
    %53 = arith.maximumf %51, %52 : vector<16x128xf32>
    %54 = arith.truncf %44 : vector<16x128xf32> to vector<16x128xbf16>
    %c0_11 = arith.constant 0 : index
    %c0_12 = arith.constant 0 : index
    %55 = vector.load %arg5[%c0_11, %c0_12] : memref<128x128xbf16, #tpu.memory_space<vmem>>, vector<128x128xbf16>
    %cst_13 = arith.constant dense<0.000000e+00> : vector<16x128xf32>
    %56 = tpu.matmul %54, %55, %cst_13 {dimension_numbers = #tpu.dot_dimension_numbers<[1], [0], [0], [1], [0, 0, 1, 1], [], []>} : vector<16x128xbf16>, vector<128x128xbf16>, vector<16x128xf32> -> vector<16x128xf32>
    %57 = arith.truncf %53 : vector<16x128xf32> to vector<16x128xbf16>
    %c0_14 = arith.constant 0 : index
    %c0_15 = arith.constant 0 : index
    %58 = vector.load %arg6[%c0_14, %c0_15] : memref<128x128xbf16, #tpu.memory_space<vmem>>, vector<128x128xbf16>
    %cst_16 = arith.constant dense<0.000000e+00> : vector<16x128xf32>
    %59 = tpu.matmul %57, %58, %cst_16 {dimension_numbers = #tpu.dot_dimension_numbers<[1], [0], [0], [1], [0, 0, 1, 1], [], []>} : vector<16x128xbf16>, vector<128x128xbf16>, vector<16x128xf32> -> vector<16x128xf32>
    %60 = arith.addf %56, %59 : vector<16x128xf32>
    %c0_17 = arith.constant 0 : index
    %c0_18 = arith.constant 0 : index
    %61 = vector.load %arg7[%c0_17, %c0_18] : memref<1x128xf32, #tpu.memory_space<vmem>>, vector<1x128xf32>
    %62 = vector.broadcast %61 : vector<1x128xf32> to vector<16x128xf32>
    %63 = arith.addf %60, %62 : vector<16x128xf32>
    %c0_19 = arith.constant 0 : index
    %c0_20 = arith.constant 0 : index
    %64 = vector.load %arg8[%c0_19, %c0_20] : memref<16x128xf32, #tpu.memory_space<vmem>>, vector<16x128xf32>
    tpu.vector_store %arg8[%c0_19, %c0_20], %63 {strides = array<i32>} : memref<16x128xf32, #tpu.memory_space<vmem>>, vector<16x128xf32>,
    return
  }
  func.func @transform_0(%arg0: i32) -> i32 {
    %c0_i32 = arith.constant 0 : i32
    %c0_i32_0 = arith.constant 0 : i32
    return %c0_i32 : i32
  }
  func.func @transform_1(%arg0: i32) -> (i32, i32) {
    %c0_i32 = arith.constant 0 : i32
    %c0_i32_0 = arith.constant 0 : i32
    return %arg0, %c0_i32 : i32, i32
  }
  func.func @transform_2(%arg0: i32) -> (i32, i32) {
    %c0_i32 = arith.constant 0 : i32
    %c0_i32_0 = arith.constant 0 : i32
    %c0_i32_1 = arith.constant 0 : i32
    return %c0_i32, %c0_i32_0 : i32, i32
  }
  func.func @transform_3(%arg0: i32) -> (i32, i32) {
    %c0_i32 = arith.constant 0 : i32
    %c0_i32_0 = arith.constant 0 : i32
    %c0_i32_1 = arith.constant 0 : i32
    return %c0_i32, %c0_i32_0 : i32, i32
  }
  func.func @transform_4(%arg0: i32) -> (i32, i32) {
    %c0_i32 = arith.constant 0 : i32
    %c0_i32_0 = arith.constant 0 : i32
    %c0_i32_1 = arith.constant 0 : i32
    return %c0_i32, %c0_i32_0 : i32, i32
  }
  func.func @transform_5(%arg0: i32) -> (i32, i32) {
    %c0_i32 = arith.constant 0 : i32
    %c0_i32_0 = arith.constant 0 : i32
    %c0_i32_1 = arith.constant 0 : i32
    return %c0_i32, %c0_i32_0 : i32, i32
  }
  func.func @transform_6(%arg0: i32) -> (i32, i32) {
    %c0_i32 = arith.constant 0 : i32
    %c0_i32_0 = arith.constant 0 : i32
    %c0_i32_1 = arith.constant 0 : i32
    return %c0_i32, %c0_i32_0 : i32, i32
  }
  func.func @transform_7(%arg0: i32) -> (i32, i32) {
    %c0_i32 = arith.constant 0 : i32
    %c0_i32_0 = arith.constant 0 : i32
    return %arg0, %c0_i32 : i32, i32
  }
}

</mosaic_0001>

<llo_original>
// kernel: tpu_custom_call.1
$region0: #{tpu_custom_call.1}
  #allocation0 [shape = 'u32[]', space=smem, size = 0x4, offset = 0x4, fixed_abs, tag = 'smem constant byte address 0x4 - core index']
  #allocation1 [shape = 'u32[144,128]{1,0:T(1,128)}', space=vmem, size = 0x12000, scoped, tag = 'internal scratch']
  %s0 = inlined_call_operand.hbm [shape: f32[6], index: 0, kind: input, shape index: {}]
  %s1 = inlined_call_operand.hbm [shape: bf16[16,256], index: 1, kind: input, shape index: {}]
  %s2 = inlined_call_operand.hbm [shape: bf16[256,128], index: 2, kind: input, shape index: {}]
  %s3 = inlined_call_operand.vmem [shape: f32[1,128], index: 3, kind: input, shape index: {}]
  %s4 = inlined_call_operand.hbm [shape: bf16[128,128], index: 4, kind: input, shape index: {}]
  %s5 = inlined_call_operand.hbm [shape: bf16[128,128], index: 5, kind: input, shape index: {}]
  %s6 = inlined_call_operand.vmem [shape: f32[1,128], index: 6, kind: input, shape index: {}]
  %s7 = inlined_call_operand.hbm [shape: f32[16,128], index: 7, kind: output, shape index: {}]
  %s8 = sld [smem:[#allocation0]]
  $region58: #{tpu_custom_call.1} parent=0
    _
  %s10 = ssub.s32 1, %s8
  %s11 = scalar_select 0, %s10, %s8
  $region1: #{tpu_custom_call.1} parent=0
    #allocation2 [shape = 'u8[512]{0}', space=smem, size = 0x200, scoped, tag = 'input window, operand 0, single buffered']
    #allocation3 [shape = 's32[1]{0}', space=sflag, size = 0x4, scoped, tag = 'scoped memory for tpu_custom_call.1']
    #allocation4 [shape = 's32[1]{0}', space=sflag, size = 0x4, scoped, tag = 'scoped memory for tpu_custom_call.1']
    #allocation5 [shape = 's32[1]{0}', space=sflag, size = 0x4, scoped, tag = 'scoped memory for tpu_custom_call.1']
    #allocation6 [shape = 'u8[8192]{0}', space=vmem, size = 0x2000, scoped, tag = 'input window, operand 1, single buffered']
    #allocation7 [shape = 'u8[65536]{0}', space=vmem, size = 0x10000, scoped, tag = 'input window, operand 2, single buffered']
    #allocation8 [shape = 's32[1]{0}', space=sflag, size = 0x4, scoped, tag = 'scoped memory for tpu_custom_call.1']
    #allocation9 [shape = 'u8[32768]{0}', space=vmem, size = 0x8000, scoped, tag = 'input window, operand 4, single buffered']
    #allocation10 [shape = 'u8[32768]{0}', space=vmem, size = 0x8000, scoped, tag = 'input window, operand 5, single buffered']
    #allocation11 [shape = 's32[1]{0}', space=sflag, size = 0x4, scoped, tag = 'scoped memory for tpu_custom_call.1']
    #allocation12 [shape = 'u8[8192]{0}', space=vmem, size = 0x2000, scoped, tag = 'output window, operand 0, single buffered']
    %12 = vsyncpa [#allocation5], 0
    %13 = vsyncpa [#allocation3], 0
    %14 = vsyncpa [#allocation8], 0
    %15 = vsyncpa [#allocation11], 0
    %16 = vsyncpa [#allocation4], 0
    // Predicated region
    $region2: #{tpu_custom_call.1} parent=1 // pred_check
      _
    $region3: #{tpu_custom_call.1} parent=1 // pred_check_branch
      %18 = sbr.rel (0) target = $region5
    $region4: #{tpu_custom_call.1} parent=1 // pred_region
      %s20 = ssub.s32 16, 16
      %21 = vsyncadd [#allocation5], %s20
      %24 = dma.hbm_to_smem %s0, 16, [#allocation2], [#allocation5]
    $region5: #{tpu_custom_call.1} parent=1 // pred_fallthru
      _
    // Predicated region
    $region6: #{tpu_custom_call.1} parent=1 // pred_check
      _
    $region7: #{tpu_custom_call.1} parent=1 // pred_check_branch
      %26 = sbr.rel (0) target = $region9
    $region8: #{tpu_custom_call.1} parent=1 // pred_region
      %s28 = ssub.s32 256, 256
      %29 = vsyncadd [#allocation3], %s28
      %s30 = sshll.u32 [#allocation6], 4
      %s31 = int_to_ptr.vmem [resolvable:$true] %s30
      %36 = dma.hbm_to_vmem [thread:$0]  %s1, 256, %s31, [#allocation3], 128, 128, 8
    $region9: #{tpu_custom_call.1} parent=1 // pred_fallthru
      _
    // Predicated region
    $region10: #{tpu_custom_call.1} parent=1 // pred_check
      _
    $region11: #{tpu_custom_call.1} parent=1 // pred_check_branch
      %38 = sbr.rel (0) target = $region13
    $region12: #{tpu_custom_call.1} parent=1 // pred_region
      %s40 = ssub.s32 2048, 2048
      %41 = vsyncadd [#allocation8], %s40
      %s42 = sshll.u32 [#allocation7], 4
      %s43 = int_to_ptr.vmem [resolvable:$true] %s42
      %48 = dma.hbm_to_vmem [thread:$0]  %s2, 2048, %s43, [#allocation8], 64, 64, 4
    $region13: #{tpu_custom_call.1} parent=1 // pred_fallthru
      _
    // Predicated region
    $region14: #{tpu_custom_call.1} parent=1 // pred_check
      _
    $region15: #{tpu_custom_call.1} parent=1 // pred_check_branch
      %50 = sbr.rel (0) target = $region17
    $region16: #{tpu_custom_call.1} parent=1 // pred_region
      _
    $region17: #{tpu_custom_call.1} parent=1 // pred_fallthru
      _
    // Predicated region
    $region18: #{tpu_custom_call.1} parent=1 // pred_check
      _
    $region19: #{tpu_custom_call.1} parent=1 // pred_check_branch
      %52 = sbr.rel (0) target = $region21
    $region20: #{tpu_custom_call.1} parent=1 // pred_region
      %s54 = ssub.s32 1024, 1024
      %55 = vsyncadd [#allocation8], %s54
      %s56 = sshll.u32 [#allocation9], 4
      %s57 = int_to_ptr.vmem [resolvable:$true] %s56
      %62 = dma.hbm_to_vmem [thread:$0]  %s4, 1024, %s57, [#allocation8], 64, 64, 4
    $region21: #{tpu_custom_call.1} parent=1 // pred_fallthru
      _
    // Predicated region
    $region22: #{tpu_custom_call.1} parent=1 // pred_check
      _
    $region23: #{tpu_custom_call.1} parent=1 // pred_check_branch
      %64 = sbr.rel (0) target = $region25
    $region24: #{tpu_custom_call.1} parent=1 // pred_region
      %s66 = ssub.s32 1024, 1024
      %67 = vsyncadd [#allocation11], %s66
      %s68 = sshll.u32 [#allocation10], 4
      %s69 = int_to_ptr.vmem [resolvable:$true] %s68
      %74 = dma.hbm_to_vmem [thread:$0]  %s5, 1024, %s69, [#allocation11], 64, 64, 4
    $region25: #{tpu_custom_call.1} parent=1 // pred_fallthru
      _
    // Predicated region
    $region26: #{tpu_custom_call.1} parent=1 // pred_check
      _
    $region27: #{tpu_custom_call.1} parent=1 // pred_check_branch
      %76 = sbr.rel (0) target = $region29
    $region28: #{tpu_custom_call.1} parent=1 // pred_region
      _
    $region29: #{tpu_custom_call.1} parent=1 // pred_fallthru
      _
    // Predicated region
    $region30: #{tpu_custom_call.1} parent=1 // pred_check
      _
    $region31: #{tpu_custom_call.1} parent=1 // pred_check_branch
      %78 = sbr.rel (0) target = $region33
    $region32: #{tpu_custom_call.1} parent=1 // pred_region
      %79 = dma.done [#allocation5], 16
    $region33: #{tpu_custom_call.1} parent=1 // pred_fallthru
      _
    // Predicated region
    $region34: #{tpu_custom_call.1} parent=1 // pred_check
      _
    $region35: #{tpu_custom_call.1} parent=1 // pred_check_branch
      %81 = sbr.rel (0) target = $region37
    $region36: #{tpu_custom_call.1} parent=1 // pred_region
      %82 = dma.done [#allocation3], 256
    $region37: #{tpu_custom_call.1} parent=1 // pred_fallthru
      _
    // Predicated region
    $region38: #{tpu_custom_call.1} parent=1 // pred_check
      _
    $region39: #{tpu_custom_call.1} parent=1 // pred_check_branch
      %84 = sbr.rel (0) target = $region41
    $region40: #{tpu_custom_call.1} parent=1 // pred_region
      %85 = dma.done [#allocation8], 2048
    $region41: #{tpu_custom_call.1} parent=1 // pred_fallthru
      _
    // Predicated region
    $region42: #{tpu_custom_call.1} parent=1 // pred_check
      _
    $region43: #{tpu_custom_call.1} parent=1 // pred_check_branch
      %87 = sbr.rel (0) target = $region45
    $region44: #{tpu_custom_call.1} parent=1 // pred_region
      %88 = dma.done [#allocation8], 1024
    $region45: #{tpu_custom_call.1} parent=1 // pred_fallthru
      _
    // Predicated region
    $region46: #{tpu_custom_call.1} parent=1 // pred_check
      _
    $region47: #{tpu_custom_call.1} parent=1 // pred_check_branch
      %90 = sbr.rel (0) target = $region49
    $region48: #{tpu_custom_call.1} parent=1 // pred_region
      %91 = dma.done [#allocation11], 1024
    $region49: #{tpu_custom_call.1} parent=1 // pred_fallthru
      _
    %92 = sfence
    %v94 = vld [vmem:[#allocation6] sm:$0xff]
    %v95 = vld [vmem:[#allocation6 + $0x8] sm:$0xff]
    %v96 = vld [vmem:[#allocation7] sm:$0xf]
    %v97 = vld [vmem:[#allocation7 + $0x4] sm:$0xf]
    %v98 = vld [vmem:[#allocation7 + $0x8] sm:$0xf]
    %v99 = vld [vmem:[#allocation7 + $0xc] sm:$0xf]
    %v100 = vld [vmem:[#allocation7 + $0x10] sm:$0xf]
    %v101 = vld [vmem:[#allocation7 + $0x14] sm:$0xf]
    %v102 = vld [vmem:[#allocation7 + $0x18] sm:$0xf]
    %v103 = vld [vmem:[#allocation7 + $0x1c] sm:$0xf]
    %v104 = vld [vmem:[#allocation7 + $0x20] sm:$0xf]
    %v105 = vld [vmem:[#allocation7 + $0x24] sm:$0xf]
    %v106 = vld [vmem:[#allocation7 + $0x28] sm:$0xf]
    %v107 = vld [vmem:[#allocation7 + $0x2c] sm:$0xf]
    %v108 = vld [vmem:[#allocation7 + $0x30] sm:$0xf]
    %v109 = vld [vmem:[#allocation7 + $0x34] sm:$0xf]
    %v110 = vld [vmem:[#allocation7 + $0x38] sm:$0xf]
    %v111 = vld [vmem:[#allocation7 + $0x3c] sm:$0xf]
    %v112 = vld [vmem:[#allocation7 + $0x40] sm:$0xf]
    %v113 = vld [vmem:[#allocation7 + $0x44] sm:$0xf]
    %v114 = vld [vmem:[#allocation7 + $0x48] sm:$0xf]
    %v115 = vld [vmem:[#allocation7 + $0x4c] sm:$0xf]
    %v116 = vld [vmem:[#allocation7 + $0x50] sm:$0xf]
    %v117 = vld [vmem:[#allocation7 + $0x54] sm:$0xf]
    %v118 = vld [vmem:[#allocation7 + $0x58] sm:$0xf]
    %v119 = vld [vmem:[#allocation7 + $0x5c] sm:$0xf]
    %v120 = vld [vmem:[#allocation7 + $0x60] sm:$0xf]
    %v121 = vld [vmem:[#allocation7 + $0x64] sm:$0xf]
    %v122 = vld [vmem:[#allocation7 + $0x68] sm:$0xf]
    %v123 = vld [vmem:[#allocation7 + $0x6c] sm:$0xf]
    %v124 = vld [vmem:[#allocation7 + $0x70] sm:$0xf]
    %v125 = vld [vmem:[#allocation7 + $0x74] sm:$0xf]
    %v126 = vld [vmem:[#allocation7 + $0x78] sm:$0xf]
    %v127 = vld [vmem:[#allocation7 + $0x7c] sm:$0xf]
    %v128 = vld [vmem:[%s3] sm:$0x1]
    %v130 = vlaneseq
    %v131 = vshrl.u32 %v130, 7
    %v132 = vsub.s32 0, %v131
    %v133 = vrot.slane %v128, %v132
    %v137 = vunpack.c.l.b16 %v94
    %v138 = vunpack.c.h.b16 %v94
    %v139 = vunpack.c.l.b16 %v95
    %v140 = vunpack.c.h.b16 %v95
    %v141 = vpack.c.b16 %v139, %v137
    %v142 = vpack.c.b16 %v140, %v138
    %v177 = vunpack.c.l.b16 %v96
    %v178 = vunpack.c.l.b16 %v97
    %v179 = vunpack.c.l.b16 %v98
    %v180 = vunpack.c.l.b16 %v99
    %v181 = vunpack.c.l.b16 %v100
    %v182 = vunpack.c.l.b16 %v101
    %v183 = vunpack.c.l.b16 %v102
    %v184 = vunpack.c.l.b16 %v103
    %v185 = vunpack.c.l.b16 %v104
    %v186 = vunpack.c.l.b16 %v105
    %v187 = vunpack.c.l.b16 %v106
    %v188 = vunpack.c.l.b16 %v107
    %v189 = vunpack.c.l.b16 %v108
    %v190 = vunpack.c.l.b16 %v109
    %v191 = vunpack.c.l.b16 %v110
    %v192 = vunpack.c.l.b16 %v111
    %v193 = vunpack.c.l.b16 %v112
    %v194 = vunpack.c.l.b16 %v113
    %v195 = vunpack.c.l.b16 %v114
    %v196 = vunpack.c.l.b16 %v115
    %v197 = vunpack.c.l.b16 %v116
    %v198 = vunpack.c.l.b16 %v117
    %v199 = vunpack.c.l.b16 %v118
    %v200 = vunpack.c.l.b16 %v119
    %v201 = vunpack.c.l.b16 %v120
    %v202 = vunpack.c.l.b16 %v121
    %v203 = vunpack.c.l.b16 %v122
    %v204 = vunpack.c.l.b16 %v123
    %v205 = vunpack.c.l.b16 %v124
    %v206 = vunpack.c.l.b16 %v125
    %v207 = vunpack.c.l.b16 %v126
    %v208 = vunpack.c.l.b16 %v127
    %v209 = vpack.c.b16 %v178, %v177
    %v210 = vpack.c.b16 %v180, %v179
    %v211 = vpack.c.b16 %v182, %v181
    %v212 = vpack.c.b16 %v184, %v183
    %v213 = vpack.c.b16 %v186, %v185
    %v214 = vpack.c.b16 %v188, %v187
    %v215 = vpack.c.b16 %v190, %v189
    %v216 = vpack.c.b16 %v192, %v191
    %v217 = vpack.c.b16 %v194, %v193
    %v218 = vpack.c.b16 %v196, %v195
    %v219 = vpack.c.b16 %v198, %v197
    %v220 = vpack.c.b16 %v200, %v199
    %v221 = vpack.c.b16 %v202, %v201
    %v222 = vpack.c.b16 %v204, %v203
    %v223 = vpack.c.b16 %v206, %v205
    %v224 = vpack.c.b16 %v208, %v207
    %241 = vmatprep.subr.bf16.mxu0 0
    %242 = vmatpush1.bf16.msra.mxu0 %v216
    %243 = vmatprep.subr.bf16.mxu0 0
    %244 = vmatpush1.bf16.msra.mxu0 %v215
    %245 = vmatprep.subr.bf16.mxu0 0
    %246 = vmatpush1.bf16.msra.mxu0 %v214
    %247 = vmatprep.subr.bf16.mxu0 0
    %248 = vmatpush1.bf16.msra.mxu0 %v213
    %249 = vmatprep.subr.bf16.mxu0 0
    %250 = vmatpush1.bf16.msra.mxu0 %v212
    %251 = vmatprep.subr.bf16.mxu0 0
    %252 = vmatpush1.bf16.msra.mxu0 %v211
    %253 = vmatprep.subr.bf16.mxu0 0
    %254 = vmatpush1.bf16.msra.mxu0 %v210
    %255 = vmatprep.subr.bf16.mxu0 0
    %256 = vmatpush1.bf16.msra.mxu0 %v209
    %257 = vmatprep.subr.bf16.mxu0 0
    %258 = vmatpush2.bf16.msra.mxu0 %v224
    %259 = vmatprep.subr.bf16.mxu0 0
    %260 = vmatpush2.bf16.msra.mxu0 %v223
    %261 = vmatprep.subr.bf16.mxu0 0
    %262 = vmatpush2.bf16.msra.mxu0 %v222
    %263 = vmatprep.subr.bf16.mxu0 0
    %264 = vmatpush2.bf16.msra.mxu0 %v221
    %265 = vmatprep.subr.bf16.mxu0 0
    %266 = vmatpush2.bf16.msra.mxu0 %v220
    %267 = vmatprep.subr.bf16.mxu0 0
    %268 = vmatpush2.bf16.msra.mxu0 %v219
    %269 = vmatprep.subr.bf16.mxu0 0
    %270 = vmatpush2.bf16.msra.mxu0 %v218
    %271 = vmatprep.subr.bf16.mxu0 0
    %272 = vmatpush2.bf16.msra.mxu0 %v217
    %273 = vmatprep.mubr.bf16.mxu0 %v142
    %274 = vmatmul.mubr.bf16.gmra.mxu0 %v141
    %v275 = vpop.f32.mrf.mxu0
    %v276 = vadd.f32 %v133, %v275
    %v277 = vpop.f32.mrf.mxu0
    %v278 = vpop.f32.mrf.mxu0
    %v279 = vadd.f32 %v133, %v278
    %v280 = vpop.f32.mrf.mxu0
    %281 = vdwg.mxu0
    %v282 = vmax.f32 %v276, 0.0
    %v283 = vmax.f32 %v279, 0.0
    %284 = vrot.lane.b32.xlu0 %v282, 1
    %v285 = vpop.permute.xlu0 %284
    %286 = vrot.lane.b32.xlu0 %v283, 1
    %v287 = vpop.permute.xlu0 %286
    %288 = vrot.lane.b32.xlu0 %v282, 127
    %v289 = vpop.permute.xlu0 %288
    %290 = vrot.lane.b32.xlu0 %v283, 127
    %v291 = vpop.permute.xlu0 %290
    %v292 = vlaneseq
    %v293 = vand.u32 %v292, 127
    %vm294 = vcmp.eq.s32.totalorder %v293, 0
    %v295 = vsel %vm294, 1, 0
    %v296 = vcvt.s32.f32 %v295
    %vm297 = vcmp.eq.s32.totalorder %v293, 7
    %v298 = vsel %vm297, 1, 0
    %v299 = vcvt.s32.f32 %v298
    %300 = vrot.lane.b32.xlu0 %v282, 121
    %v301 = vpop.permute.xlu0 %300
    %302 = vrot.lane.b32.xlu0 %v283, 121
    %v303 = vpop.permute.xlu0 %302
    %v304 = vmul.f32 %v301, %v296
    %v305 = vmul.f32 %v303, %v296
    %v306 = vadd.f32 %v285, %v304
    %v307 = vadd.f32 %v287, %v305
    %308 = vrot.lane.b32.xlu0 %v282, 7
    %v309 = vpop.permute.xlu0 %308
    %310 = vrot.lane.b32.xlu0 %v283, 7
    %v311 = vpop.permute.xlu0 %310
    %v312 = vmul.f32 %v309, %v299
    %v313 = vmul.f32 %v311, %v299
    %v314 = vadd.f32 %v289, %v312
    %v315 = vadd.f32 %v291, %v313
    %v316 = vadd.f32 %v306, %v314
    %v317 = vadd.f32 %v307, %v315
    %v318 = vmul.f32 %v316, 0.5
    %v319 = vmul.f32 %v317, 0.5
    %s320 = sld [smem:[#allocation2]]
    %s321 = sld [smem:[#allocation2 + $0x1]]
    %s322 = sld [smem:[#allocation2 + $0x2]]
    %s323 = sld [smem:[#allocation2 + $0x3]]
    %s324 = sld [smem:[#allocation2 + $0x4]]
    %s325 = sld [smem:[#allocation2 + $0x5]]
    %v326 = vstv %s320
    %v327 = vmul.f32 %v318, %v326
    %v328 = vmul.f32 %v319, %v326
    %v329 = vstv %s322
    %v330 = vmul.f32 %v282, %v329
    %v331 = vmul.f32 %v283, %v329
    %v332 = vadd.f32 %v327, %v330
    %v333 = vadd.f32 %v328, %v331
    %v334 = vstv %s324
    %v335 = vadd.f32 %v332, %v334
    %v336 = vadd.f32 %v333, %v334
    %v337 = vmax.f32 %v335, 0.0
    %v338 = vmax.f32 %v336, 0.0
    %v339 = vstv %s321
    %v340 = vmul.f32 %v318, %v339
    %v341 = vmul.f32 %v319, %v339
    %v342 = vstv %s323
    %v343 = vmul.f32 %v282, %v342
    %v344 = vmul.f32 %v283, %v342
    %v345 = vadd.f32 %v340, %v343
    %v346 = vadd.f32 %v341, %v344
    %v347 = vstv %s325
    %v348 = vadd.f32 %v345, %v347
    %v349 = vadd.f32 %v346, %v347
    %v350 = vmax.f32 %v348, 0.0
    %v351 = vmax.f32 %v349, 0.0
    %v352 = vpack.c.bf16 %v338, %v337
    %v353 = vld [vmem:[#allocation9] sm:$0xf]
    %v354 = vld [vmem:[#allocation9 + $0x4] sm:$0xf]
    %v355 = vld [vmem:[#allocation9 + $0x8] sm:$0xf]
    %v356 = vld [vmem:[#allocation9 + $0xc] sm:$0xf]
    %v357 = vld [vmem:[#allocation9 + $0x10] sm:$0xf]
    %v358 = vld [vmem:[#allocation9 + $0x14] sm:$0xf]
    %v359 = vld [vmem:[#allocation9 + $0x18] sm:$0xf]
    %v360 = vld [vmem:[#allocation9 + $0x1c] sm:$0xf]
    %v361 = vld [vmem:[#allocation9 + $0x20] sm:$0xf]
    %v362 = vld [vmem:[#allocation9 + $0x24] sm:$0xf]
    %v363 = vld [vmem:[#allocation9 + $0x28] sm:$0xf]
    %v364 = vld [vmem:[#allocation9 + $0x2c] sm:$0xf]
    %v365 = vld [vmem:[#allocation9 + $0x30] sm:$0xf]
    %v366 = vld [vmem:[#allocation9 + $0x34] sm:$0xf]
    %v367 = vld [vmem:[#allocation9 + $0x38] sm:$0xf]
    %v368 = vld [vmem:[#allocation9 + $0x3c] sm:$0xf]
    %v369 = vpack.c.bf16 %v351, %v350
    %v370 = vld [vmem:[#allocation10] sm:$0xf]
    %v371 = vld [vmem:[#allocation10 + $0x4] sm:$0xf]
    %v372 = vld [vmem:[#allocation10 + $0x8] sm:$0xf]
    %v373 = vld [vmem:[#allocation10 + $0xc] sm:$0xf]
    %v374 = vld [vmem:[#allocation10 + $0x10] sm:$0xf]
    %v375 = vld [vmem:[#allocation10 + $0x14] sm:$0xf]
    %v376 = vld [vmem:[#allocation10 + $0x18] sm:$0xf]
    %v377 = vld [vmem:[#allocation10 + $0x1c] sm:$0xf]
    %v378 = vld [vmem:[#allocation10 + $0x20] sm:$0xf]
    %v379 = vld [vmem:[#allocation10 + $0x24] sm:$0xf]
    %v380 = vld [vmem:[#allocation10 + $0x28] sm:$0xf]
    %v381 = vld [vmem:[#allocation10 + $0x2c] sm:$0xf]
    %v382 = vld [vmem:[#allocation10 + $0x30] sm:$0xf]
    %v383 = vld [vmem:[#allocation10 + $0x34] sm:$0xf]
    %v384 = vld [vmem:[#allocation10 + $0x38] sm:$0xf]
    %v385 = vld [vmem:[#allocation10 + $0x3c] sm:$0xf]
    %v402 = vunpack.c.l.b16 %v370
    %v403 = vunpack.c.l.b16 %v371
    %v404 = vunpack.c.l.b16 %v372
    %v405 = vunpack.c.l.b16 %v373
    %v406 = vunpack.c.l.b16 %v374
    %v407 = vunpack.c.l.b16 %v375
    %v408 = vunpack.c.l.b16 %v376
    %v409 = vunpack.c.l.b16 %v377
    %v410 = vunpack.c.l.b16 %v378
    %v411 = vunpack.c.l.b16 %v379
    %v412 = vunpack.c.l.b16 %v380
    %v413 = vunpack.c.l.b16 %v381
    %v414 = vunpack.c.l.b16 %v382
    %v415 = vunpack.c.l.b16 %v383
    %v416 = vunpack.c.l.b16 %v384
    %v417 = vunpack.c.l.b16 %v385
    %v418 = vpack.c.b16 %v403, %v402
    %v419 = vpack.c.b16 %v405, %v404
    %v420 = vpack.c.b16 %v407, %v406
    %v421 = vpack.c.b16 %v409, %v408
    %v422 = vpack.c.b16 %v411, %v410
    %v423 = vpack.c.b16 %v413, %v412
    %v424 = vpack.c.b16 %v415, %v414
    %v425 = vpack.c.b16 %v417, %v416
    %434 = vmatprep.subr.bf16.mxu0 0
    %435 = vmatpush1.bf16.msra.mxu0 %v425
    %436 = vmatprep.subr.bf16.mxu0 0
    %437 = vmatpush1.bf16.msra.mxu0 %v424
    %438 = vmatprep.subr.bf16.mxu0 0
    %439 = vmatpush1.bf16.msra.mxu0 %v423
    %440 = vmatprep.subr.bf16.mxu0 0
    %441 = vmatpush1.bf16.msra.mxu0 %v422
    %442 = vmatprep.subr.bf16.mxu0 0
    %443 = vmatpush1.bf16.msra.mxu0 %v421
    %444 = vmatprep.subr.bf16.mxu0 0
    %445 = vmatpush1.bf16.msra.mxu0 %v420
    %446 = vmatprep.subr.bf16.mxu0 0
    %447 = vmatpush1.bf16.msra.mxu0 %v419
    %448 = vmatprep.subr.bf16.mxu0 0
    %449 = vmatpush1.bf16.msra.mxu0 %v418
    %450 = vmatprep.subr.bf16.mxu0 0
    %451 = vmatpush2.bf16.msra.mxu0 0
    %452 = vmatprep.subr.bf16.mxu0 0
    %453 = vmatpush2.bf16.msra.mxu0 0
    %454 = vmatprep.subr.bf16.mxu0 0
    %455 = vmatpush2.bf16.msra.mxu0 0
    %456 = vmatprep.subr.bf16.mxu0 0
    %457 = vmatpush2.bf16.msra.mxu0 0
    %458 = vmatprep.subr.bf16.mxu0 0
    %459 = vmatpush2.bf16.msra.mxu0 0
    %460 = vmatprep.subr.bf16.mxu0 0
    %461 = vmatpush2.bf16.msra.mxu0 0
    %462 = vmatprep.subr.bf16.mxu0 0
    %463 = vmatpush2.bf16.msra.mxu0 0
    %464 = vmatprep.subr.bf16.mxu0 0
    %465 = vmatpush2.bf16.msra.mxu0 0
    %466 = vmatprep.mubr.bf16.mxu0 0
    %467 = vmatmul.mubr.bf16.gmra.mxu0 %v369
    %v468 = vpop.f32.mrf.mxu0
    %v469 = vadd.f32 0.0, %v468
    %v470 = vpop.f32.mrf.mxu0
    %v471 = vpop.f32.mrf.mxu0
    %v472 = vadd.f32 0.0, %v471
    %v473 = vpop.f32.mrf.mxu0
    %474 = vdwg.mxu0
    %v491 = vunpack.c.l.b16 %v353
    %v492 = vunpack.c.l.b16 %v354
    %v493 = vunpack.c.l.b16 %v355
    %v494 = vunpack.c.l.b16 %v356
    %v495 = vunpack.c.l.b16 %v357
    %v496 = vunpack.c.l.b16 %v358
    %v497 = vunpack.c.l.b16 %v359
    %v498 = vunpack.c.l.b16 %v360
    %v499 = vunpack.c.l.b16 %v361
    %v500 = vunpack.c.l.b16 %v362
    %v501 = vunpack.c.l.b16 %v363
    %v502 = vunpack.c.l.b16 %v364
    %v503 = vunpack.c.l.b16 %v365
    %v504 = vunpack.c.l.b16 %v366
    %v505 = vunpack.c.l.b16 %v367
    %v506 = vunpack.c.l.b16 %v368
    %v507 = vpack.c.b16 %v492, %v491
    %v508 = vpack.c.b16 %v494, %v493
    %v509 = vpack.c.b16 %v496, %v495
    %v510 = vpack.c.b16 %v498, %v497
    %v511 = vpack.c.b16 %v500, %v499
    %v512 = vpack.c.b16 %v502, %v501
    %v513 = vpack.c.b16 %v504, %v503
    %v514 = vpack.c.b16 %v506, %v505
    %523 = vmatprep.subr.bf16.mxu0 0
    %524 = vmatpush1.bf16.msra.mxu0 %v514
    %525 = vmatprep.subr.bf16.mxu0 0
    %526 = vmatpush1.bf16.msra.mxu0 %v513
    %527 = vmatprep.subr.bf16.mxu0 0
    %528 = vmatpush1.bf16.msra.mxu0 %v512
    %529 = vmatprep.subr.bf16.mxu0 0
    %530 = vmatpush1.bf16.msra.mxu0 %v511
    %531 = vmatprep.subr.bf16.mxu0 0
    %532 = vmatpush1.bf16.msra.mxu0 %v510
    %533 = vmatprep.subr.bf16.mxu0 0
    %534 = vmatpush1.bf16.msra.mxu0 %v509
    %535 = vmatprep.subr.bf16.mxu0 0
    %536 = vmatpush1.bf16.msra.mxu0 %v508
    %537 = vmatprep.subr.bf16.mxu0 0
    %538 = vmatpush1.bf16.msra.mxu0 %v507
    %539 = vmatprep.subr.bf16.mxu0 0
    %540 = vmatpush2.bf16.msra.mxu0 0
    %541 = vmatprep.subr.bf16.mxu0 0
    %542 = vmatpush2.bf16.msra.mxu0 0
    %543 = vmatprep.subr.bf16.mxu0 0
    %544 = vmatpush2.bf16.msra.mxu0 0
    %545 = vmatprep.subr.bf16.mxu0 0
    %546 = vmatpush2.bf16.msra.mxu0 0
    %547 = vmatprep.subr.bf16.mxu0 0
    %548 = vmatpush2.bf16.msra.mxu0 0
    %549 = vmatprep.subr.bf16.mxu0 0
    %550 = vmatpush2.bf16.msra.mxu0 0
    %551 = vmatprep.subr.bf16.mxu0 0
    %552 = vmatpush2.bf16.msra.mxu0 0
    %553 = vmatprep.subr.bf16.mxu0 0
    %554 = vmatpush2.bf16.msra.mxu0 0
    %555 = vmatprep.mubr.bf16.mxu0 0
    %556 = vmatmul.mubr.bf16.gmra.mxu0 %v352
    %v557 = vpop.f32.mrf.mxu0
    %v558 = vadd.f32 %v469, %v557
    %v559 = vpop.f32.mrf.mxu0
    %v560 = vpop.f32.mrf.mxu0
    %v561 = vadd.f32 %v472, %v560
    %v562 = vpop.f32.mrf.mxu0
    %563 = vdwg.mxu0
    %v564 = vld [vmem:[%s6] sm:$0x1]
    %v566 = vlaneseq
    %v567 = vshrl.u32 %v566, 7
    %v568 = vsub.s32 0, %v567
    %v569 = vrot.slane %v564, %v568
    %v571 = vadd.f32 %v558, %v569
    %v572 = vadd.f32 %v561, %v569
    %573 = vst [vmem:[#allocation12] sm:$0xff] %v571
    %574 = vst [vmem:[#allocation12 + $0x8] sm:$0xff] %v572
    // Predicated region
    $region50: #{tpu_custom_call.1} parent=1 // pred_check
      _
    $region51: #{tpu_custom_call.1} parent=1 // pred_check_branch
      %576 = sbr.rel (0) target = $region53
    $region52: #{tpu_custom_call.1} parent=1 // pred_region
      %s578 = ssub.s32 256, 256
      %579 = vsyncadd [#allocation4], %s578
      %s580 = sshll.u32 [#allocation12], 4
      %s581 = int_to_ptr.vmem [resolvable:$true] %s580
      %586 = dma.vmem_to_hbm [thread:$0]  %s581, 256, %s7, [#allocation4], 128, 128, 8
    $region53: #{tpu_custom_call.1} parent=1 // pred_fallthru
      _
    // Predicated region
    $region54: #{tpu_custom_call.1} parent=1 // pred_check
      _
    $region55: #{tpu_custom_call.1} parent=1 // pred_check_branch
      %588 = sbr.rel (0) target = $region57
    $region56: #{tpu_custom_call.1} parent=1 // pred_region
      %589 = dma.done [#allocation4], 256
    $region57: #{tpu_custom_call.1} parent=1 // pred_fallthru
      _
    %590 = vsyncpa [#allocation3], 1
    %591 = vsyncpa [#allocation8], 1
    %592 = vsyncpa [#allocation11], 1
    %593 = vsyncpa [#allocation4], 1
    %594 = vsyncpa [#allocation5], 1

</llo_original>
